<compile_context>
chip_gen: v7x
topology: tpu7x:2x2x1
jax: 0.10.0
libtpu: 0.0.40
codegen_flags: <defaults>
</compile_context>

<pallas_src>
import math

import jax
import jax.numpy as jnp
from jax.experimental import pallas as pl
from jax.experimental.pallas import tpu as pltpu


def _round_up(x, m):
    return ((x + m - 1) // m) * m


def _log2_nll_kernel(pred_ref, tgt_ref, out_ref):
    """pred_ref: (TN, C) native dtype, tgt_ref: (TN, 1) int32, out_ref: (1, 1) f32 SMEM.

    Writes sum_i pred[i, target_i] for this tile. One independent partial per
    grid step -> no carried state, grid axis is fully 'parallel'.
    """
    pred = pred_ref[...]                                            # (TN, C) native dtype
    tgt = tgt_ref[...]                                              # (TN, 1) int32
    class_ids = jax.lax.broadcasted_iota(jnp.int32, pred.shape, 1)  # (TN, C)
    # Select in the native dtype (bf16 stays packed). Each row has exactly one
    # nonzero, so the per-row lane reduce below is exact even in bf16.
    sel = jnp.where(class_ids == tgt, pred, jnp.zeros_like(pred))   # (TN, C) native
    rows = jnp.sum(sel, axis=1, keepdims=True)                      # (TN, 1) native, exact
    out_ref[0, 0] = jnp.sum(rows.astype(jnp.float32))               # f32 tile partial


def log2_nll_loss(pred, target, *, tile_n=None):
    """pred: (N, C) log-probs, target: (N,) class indices. Returns scalar f32.

    loss = mean_i(-pred[i, target_i]) / ln(2)  ==  NLLLoss(reduction='mean') / ln 2
    """
    assert pred.ndim == 2, "expected (N, C) log-probabilities"
    n, c = pred.shape
    itemsize = jnp.dtype(pred.dtype).itemsize

    tgt = target.astype(jnp.int32).reshape(n, 1)  # == target.long()

    # ---- Per-generation VMEM budget -> row-tile size -------------------------------
    try:
        vmem_cap = int(pltpu.get_tpu_info().vmem_capacity_bytes)
    except Exception:  # non-TPU backend / interpret mode fallback
        vmem_cap = 64 * 1024 * 1024
    # One pred block ~ 1/8 of VMEM: 8 MiB on v7x (64 MiB VMEM), 16 MiB on v5e/v6e (128 MiB).
    block_budget = max(1 << 20, vmem_cap // 8)
    # Conservative VMEM bytes per row *including* (8,128)-tile lane padding for
    # narrow C and for the (TN, 1) int32 target column, so we never overflow VMEM.
    padded_c = _round_up(c, 128)
    row_vmem = padded_c * itemsize + 128 * 4
    rows_by_budget = max(8, (block_budget // row_vmem) // 8 * 8)

    if tile_n is None:
        tn = rows_by_budget
        # Keep >= 2 tiles whenever there is enough work so the 'parallel' grid
        # axis can be sharded across both v7x TensorCores.
        if n > 8:
            tn = min(tn, _round_up(pl.cdiv(n, 2), 8))
    else:
        tn = _round_up(min(int(tile_n), n), 8)
    tn = max(8, min(tn, _round_up(n, 8)))

    num_tiles = pl.cdiv(n, tn)

    # Pad N with zero rows / target 0: padded rows pick pred[i, 0] == 0, so the
    # sum is exact and every block is fully in-bounds (no in-kernel masking).
    n_pad = num_tiles * tn
    if n_pad != n:
        pred = jnp.pad(pred, ((0, n_pad - n), (0, 0)))
        tgt = jnp.pad(tgt, ((0, n_pad - n), (0, 0)))

    # Double-buffered inputs (+1 MiB headroom), clamped to 3/4 of physical VMEM
    # (=> up to ~48 MiB on v7x, ~96 MiB on v5e/v6e).
    vmem_needed = 2 * (tn * padded_c * itemsize + tn * 128 * 4) + (1 << 20)
    vmem_limit = int(min(max(vmem_needed, 16 * 1024 * 1024), (vmem_cap * 3) // 4))

    cost = pl.CostEstimate(
        flops=3 * n_pad * c,
        transcendentals=0,
        bytes_accessed=n_pad * c * itemsize + n_pad * 4 + num_tiles * 4,
    )

    partials = pl.pallas_call(
        _log2_nll_kernel,
        out_shape=jax.ShapeDtypeStruct((num_tiles, 1), jnp.float32),
        grid=(num_tiles,),
        in_specs=[
            pl.BlockSpec((tn, c), lambda i: (i, 0)),
            pl.BlockSpec((tn, 1), lambda i: (i, 0)),
        ],
        out_specs=pl.BlockSpec(
            (1, 1), lambda i: (i, 0), memory_space=pltpu.MemorySpace.SMEM
        ),
        compiler_params=pltpu.CompilerParams(
            dimension_semantics=("parallel",),
            vmem_limit_bytes=vmem_limit,
        ),
        cost_estimate=cost,
    )(pred, tgt)

    # loss = -(sum of picked log-probs) / (N * ln 2)  (single scalar multiply).
    return -jnp.sum(partials) * jnp.float32(1.0 / (n * math.log(2.0)))


def _reference(pred, target):
    # pure-JAX reference of torch.nn.NLLLoss(reduction='mean')(pred, target.long()) / ln(2)
    logp = pred.astype(jnp.float32)
    idx = target.astype(jnp.int32)[:, None]
    picked = jnp.take_along_axis(logp, idx, axis=-1)[:, 0]
    return -jnp.mean(picked) / jnp.float32(math.log(2.0))


if __name__ == "__main__":
    key = jax.random.PRNGKey(0)
    k1, k2, k3, k4, k5, k6 = jax.random.split(key, 6)

    # Case 1: small single-tile case, f32 log-probs, float targets (cast like .long()).
    N, C = 8, 32
    pred = jax.nn.log_softmax(jax.random.normal(k1, (N, C), dtype=jnp.float32), axis=-1)
    target = jax.random.randint(k2, (N,), 0, C).astype(jnp.float32)
    out = jax.block_until_ready(log2_nll_loss(pred, target))
    ref = _reference(pred, target)
    assert jnp.allclose(out, ref, atol=1e-5, rtol=1e-5), (out, ref)

    # Case 2: bf16 log-probs, explicit small tile, N not a multiple of the tile
    # -> exercises padding, multi-tile partials, bf16-native select path.
    N2, C2 = 30, 32
    pred2 = jax.nn.log_softmax(
        jax.random.normal(k3, (N2, C2), dtype=jnp.float32), axis=-1
    ).astype(jnp.bfloat16)
    target2 = jax.random.randint(k4, (N2,), 0, C2)
    out2 = jax.block_until_ready(log2_nll_loss(pred2, target2, tile_n=8))
    ref2 = _reference(pred2, target2)
    assert jnp.allclose(out2, ref2, atol=1e-4, rtol=1e-4), (out2, ref2)

    # Case 3: auto (budget-driven) tiling, non-power-of-two C, N forcing a 2-way
    # parallel split plus row padding.
    N3, C3 = 300, 48
    pred3 = jax.nn.log_softmax(jax.random.normal(k5, (N3, C3), dtype=jnp.float32), axis=-1)
    target3 = jax.random.randint(k6, (N3,), 0, C3)
    out3 = jax.block_until_ready(log2_nll_loss(pred3, target3))
    ref3 = _reference(pred3, target3)
    assert jnp.allclose(out3, ref3, atol=1e-5, rtol=1e-5), (out3, ref3)

    print("KERNEL_OK")
</pallas_src>

<mosaic_0001>
module attributes {stable_mosaic.version = 11 : i64} {
  func.func @_log2_nll_kernel(%arg0: i32, %arg1: memref<8x32xf32, #tpu.memory_space<vmem>>, %arg2: memref<8x1xi32, #tpu.memory_space<vmem>>, %arg3: memref<1x1xf32, #tpu.memory_space<smem>>) attributes {dimension_semantics = [#tpu.dimension_semantics<parallel>], iteration_bounds = array<i64: 1>, scalar_prefetch = 0 : i64, scratch_operands = 0 : i64, tpu.core_type = #tpu.core_type<tc>, window_params = [{transform_indices = @transform_0, window_bounds = array<i64: 8, 32>}, {transform_indices = @transform_1, window_bounds = array<i64: 8, 1>}, {transform_indices = @transform_2, window_bounds = array<i64: 1, 1>}]} {
    %c0 = arith.constant 0 : index
    %c0_0 = arith.constant 0 : index
    %0 = vector.load %arg1[%c0, %c0_0] : memref<8x32xf32, #tpu.memory_space<vmem>>, vector<8x32xf32>
    %c0_1 = arith.constant 0 : index
    %c0_2 = arith.constant 0 : index
    %1 = vector.load %arg2[%c0_1, %c0_2] : memref<8x1xi32, #tpu.memory_space<vmem>>, vector<8x1xi32>
    %2 = tpu.iota {dimensions = array<i32: 1>} : vector<8x32xi32>
    %3 = vector.broadcast %1 : vector<8x1xi32> to vector<8x32xi32>
    %4 = arith.cmpi eq, %2, %3 : vector<8x32xi32>
    %cst = arith.constant 0.000000e+00 : f32
    %5 = vector.broadcast %cst : f32 to vector<8x32xf32>
    %6 = arith.select %4, %0, %5 : vector<8x32xi1>, vector<8x32xf32>
    %cst_3 = arith.constant dense<0.000000e+00> : vector<8xf32>
    %7 = vector.multi_reduction <add>, %6, %cst_3 [1] : vector<8x32xf32> to vector<8xf32>
    %8 = vector.shape_cast %7 : vector<8xf32> to vector<8x1xf32>
    %9 = vector.shape_cast %8 : vector<8x1xf32> to vector<1x8x1xf32>
    %cst_4 = arith.constant dense<0.000000e+00> : vector<1xf32>
    %10 = vector.multi_reduction <add>, %9, %cst_4 [1, 2] : vector<1x8x1xf32> to vector<1xf32>
    %11 = vector.shape_cast %10 : vector<1xf32> to vector<1x1x1xf32>
    %12 = vector.extract %11[0, 0, 0] : f32 from vector<1x1x1xf32>
    %c0_5 = arith.constant 0 : index
    %c0_6 = arith.constant 0 : index
    %13 = memref.load %arg3[%c0_5, %c0_6] : memref<1x1xf32, #tpu.memory_space<smem>>
    memref.store %12, %arg3[%c0_5, %c0_6] : memref<1x1xf32, #tpu.memory_space<smem>>
    return
  }
  func.func @transform_0(%arg0: i32) -> (i32, i32) {
    %c0_i32 = arith.constant 0 : i32
    %c0_i32_0 = arith.constant 0 : i32
    return %arg0, %c0_i32 : i32, i32
  }
  func.func @transform_1(%arg0: i32) -> (i32, i32) {
    %c0_i32 = arith.constant 0 : i32
    %c0_i32_0 = arith.constant 0 : i32
    return %arg0, %c0_i32 : i32, i32
  }
  func.func @transform_2(%arg0: i32) -> (i32, i32) {
    %c0_i32 = arith.constant 0 : i32
    %c0_i32_0 = arith.constant 0 : i32
    return %arg0, %c0_i32 : i32, i32
  }
}

</mosaic_0001>

<llo_original>
// kernel: tpu_custom_call.1
$region0: #{tpu_custom_call.1}
  #allocation0 [shape = 'u32[]', space=smem, size = 0x4, offset = 0x4, fixed_abs, tag = 'smem constant byte address 0x4 - core index']
  #allocation1 [shape = 'u32[144,128]{1,0:T(1,128)}', space=vmem, size = 0x12000, scoped, tag = 'internal scratch']
  %s0 = inlined_call_operand.vmem [shape: f32[8,32], index: 0, kind: input, shape index: {}]
  %s1 = inlined_call_operand.vmem [shape: s32[8,1], index: 1, kind: input, shape index: {}]
  %s2 = inlined_call_operand.hbm [shape: f32[1,1], index: 2, kind: output, shape index: {}]
  %s3 = sld [smem:[#allocation0]]
  $region18: #{tpu_custom_call.1} parent=0
    _
  %s5 = ssub.s32 1, %s3
  %s6 = scalar_select 0, %s5, %s3
  $region1: #{tpu_custom_call.1} parent=0
    #allocation2 [shape = 'u8[512]{0}', space=smem, size = 0x200, scoped, tag = 'output window, operand 0, single buffered']
    #allocation3 [shape = 's32[1]{0}', space=sflag, size = 0x4, scoped, tag = 'scoped memory for tpu_custom_call.1']
    %7 = vsyncpa [#allocation3], 0
    // Predicated region
    $region2: #{tpu_custom_call.1} parent=1 // pred_check
      _
    $region3: #{tpu_custom_call.1} parent=1 // pred_check_branch
      %9 = sbr.rel (0) target = $region5
    $region4: #{tpu_custom_call.1} parent=1 // pred_region
      _
    $region5: #{tpu_custom_call.1} parent=1 // pred_fallthru
      _
    // Predicated region
    $region6: #{tpu_custom_call.1} parent=1 // pred_check
      _
    $region7: #{tpu_custom_call.1} parent=1 // pred_check_branch
      %11 = sbr.rel (0) target = $region9
    $region8: #{tpu_custom_call.1} parent=1 // pred_region
      _
    $region9: #{tpu_custom_call.1} parent=1 // pred_fallthru
      _
    %v12 = vld [vmem:[%s0] sm:$0xff]
    %v13 = vld [vmem:[%s1] sm:$0xff]
    %v14 = vlaneseq
    %v15 = vand.u32 %v14, 127
    %16 = vset.pattern.permute.xlu0 0
    %17 = vperm.xlu0 %16, %v13
    %v18 = vpop.permute.xlu0 %17
    %vm19 = vcmp.eq.s32.totalorder %v15, %v18
    %v20 = vsel %vm19, %v12, 0.0
    %vm21 = vcmask 261120
    %v22 = vsel %vm21, %v20, 0.0
    %23 = vadd.xlane.f32.xlu0 %v22
    %v24 = vpop.xlane.xlu0 %23
    %vm25 = vcmask 7168
    %v26 = vsel %vm25, %v24, 0.0
    %27 = vadd.xlane.f32.xlu0 %v26
    %v28 = vpop.xlane.xlu0 %27
    %v29 = vrot.slane %v28, 4
    %v30 = vadd.f32 %v28, %v29
    %v31 = vrot.slane %v30, 2
    %v32 = vadd.f32 %v30, %v31
    %v33 = vrot.slane %v32, 1
    %v34 = vadd.f32 %v32, %v33
    %s35 = vtos %v34
    %s36 = scalar_lea.smem [#allocation2], 0
    %37 = sst [smem:[%s36]] %s35
    // Predicated region
    $region10: #{tpu_custom_call.1} parent=1 // pred_check
      _
    $region11: #{tpu_custom_call.1} parent=1 // pred_check_branch
      %39 = sbr.rel (0) target = $region13
    $region12: #{tpu_custom_call.1} parent=1 // pred_region
      %s41 = ssub.s32 16, 16
      %42 = vsyncadd [#allocation3], %s41
      %45 = dma.smem_to_hbm [#allocation2], 16, %s2, [#allocation3]
    $region13: #{tpu_custom_call.1} parent=1 // pred_fallthru
      _
    // Predicated region
    $region14: #{tpu_custom_call.1} parent=1 // pred_check
      _
    $region15: #{tpu_custom_call.1} parent=1 // pred_check_branch
      %47 = sbr.rel (0) target = $region17
    $region16: #{tpu_custom_call.1} parent=1 // pred_region
      %48 = dma.done [#allocation3], 16
    $region17: #{tpu_custom_call.1} parent=1 // pred_fallthru
      _
    %49 = sfence
    %50 = vsyncpa [#allocation3], 1

</llo_original>
